<compile_context>
chip_gen: v7x
topology: tpu7x:2x2x1
jax: 0.10.0
libtpu: 0.0.40
codegen_flags: <defaults>
</compile_context>

<pallas_src>
import functools

import numpy as np
import jax
import jax.numpy as jnp
from jax.experimental import pallas as pl
from jax.experimental.pallas import tpu as pltpu

EPS = 1e-5  # PyTorch default eps for InstanceNorm2d / BatchNorm2d


# ---------------------------------------------------------------------------
# Fused Pallas kernel
# ---------------------------------------------------------------------------
def ibn_kernel(x_ref, gamma_ref, beta_ref, o_ref, *, half1):
    """Fused IBN forward.

    x_ref:     (N, C, HW) f32  -- NCHW input with spatial flattened onto the lane axis
    gamma_ref: (1, C, 1)  f32  -- [IN.weight (half1) ; BN.weight (C-half1)]
    beta_ref:  (1, C, 1)  f32  -- [IN.bias   (half1) ; BN.bias   (C-half1)]
    o_ref:     (N, C, HW) f32
    """
    x = x_ref[...]
    n, c, hw = x.shape

    # ---- per-(sample, channel) instance statistics (lane reductions) -------------
    mu_i = jnp.mean(x, axis=2, keepdims=True)                     # (n, c, 1)
    var_i = jnp.mean((x - mu_i) ** 2, axis=2, keepdims=True)      # (n, c, 1)

    # ---- per-channel batch statistics (training-mode BatchNorm, biased var) ------
    cnt = float(n * hw)
    mu_b = jnp.sum(jnp.sum(x, axis=2, keepdims=True),
                   axis=0, keepdims=True) / cnt                   # (1, c, 1)
    d = x - mu_b
    var_b = jnp.sum(jnp.sum(d * d, axis=2, keepdims=True),
                    axis=0, keepdims=True) / cnt                  # (1, c, 1)
    mu_b = jnp.broadcast_to(mu_b, (n, c, 1))
    var_b = jnp.broadcast_to(var_b, (n, c, 1))

    # ---- channel mask select: IN stats for ch < half1, BN stats otherwise --------
    ch = jax.lax.broadcasted_iota(jnp.int32, (n, c, 1), 1)
    is_in = ch < half1
    mu = jnp.where(is_in, mu_i, mu_b)
    var = jnp.where(is_in, var_i, var_b)

    # ---- folded per-channel affine: one fused multiply-add over the block --------
    scale = gamma_ref[...] * jax.lax.rsqrt(var + EPS)             # (n, c, 1)
    shift = beta_ref[...] - mu * scale
    o_ref[...] = x * scale + shift

    # TODO(synk): nn.BatchNorm2d running_mean / running_var buffer updates (a
    # training-time side effect) are not emitted; only the normalized output is.


# ---------------------------------------------------------------------------
# Wrapper
# ---------------------------------------------------------------------------
def ibn_forward(x_nchw, in_g, in_b, bn_g, bn_b):
    N, C, H, W = x_nchw.shape
    HW = H * W
    half1 = C // 2

    # NCHW -> (N, C, H*W): free reshape, lane axis carries H*W (multiple of 128).
    x3 = x_nchw.reshape(N, C, HW).astype(jnp.float32)
    gamma = jnp.concatenate([in_g, bn_g]).reshape(1, C, 1).astype(jnp.float32)
    beta = jnp.concatenate([in_b, bn_b]).reshape(1, C, 1).astype(jnp.float32)

    kernel = functools.partial(ibn_kernel, half1=half1)

    y = pl.pallas_call(
        kernel,
        out_shape=jax.ShapeDtypeStruct((N, C, HW), jnp.float32),
        grid=(1,),
        in_specs=[pl.BlockSpec((N, C, HW), lambda i: (0, 0, 0)),
                  pl.BlockSpec((1, C, 1), lambda i: (0, 0, 0)),
                  pl.BlockSpec((1, C, 1), lambda i: (0, 0, 0))],
        out_specs=pl.BlockSpec((N, C, HW), lambda i: (0, 0, 0)),
        compiler_params=pltpu.CompilerParams(
            dimension_semantics=("arbitrary",)),
    )(x3, gamma, beta)

    return y.reshape(N, C, H, W)


# ---------------------------------------------------------------------------
# Pure-JAX reference (independent math: explicit split / normalize / concat)
# ---------------------------------------------------------------------------
def reference_forward(x_nchw, in_g, in_b, bn_g, bn_b):
    x = x_nchw.astype(jnp.float32)
    half1 = x.shape[1] // 2

    a = x[:, :half1]
    mu_a = a.mean(axis=(2, 3), keepdims=True)
    var_a = ((a - mu_a) ** 2).mean(axis=(2, 3), keepdims=True)
    out1 = ((a - mu_a) * jax.lax.rsqrt(var_a + EPS)
            * in_g.reshape(1, -1, 1, 1) + in_b.reshape(1, -1, 1, 1))

    b = x[:, half1:]
    mu_b = b.mean(axis=(0, 2, 3), keepdims=True)
    var_b = ((b - mu_b) ** 2).mean(axis=(0, 2, 3), keepdims=True)
    out2 = ((b - mu_b) * jax.lax.rsqrt(var_b + EPS)
            * bn_g.reshape(1, -1, 1, 1) + bn_b.reshape(1, -1, 1, 1))

    return jnp.concatenate([out1, out2], axis=1)


# ---------------------------------------------------------------------------
if __name__ == "__main__":
    # Small shapes consistent with the module: planes=8 -> IN(4) + BN(4), 16x16 spatial.
    N, planes, H, W = 2, 8, 16, 16
    half1 = planes // 2
    half2 = planes - half1

    key = jax.random.PRNGKey(0)
    ks = jax.random.split(key, 5)

    in_g = 1.0 + 0.1 * jax.random.normal(ks[0], (half1,), jnp.float32)  # IN.weight
    in_b = 0.1 * jax.random.normal(ks[1], (half1,), jnp.float32)        # IN.bias
    bn_g = 1.0 + 0.1 * jax.random.normal(ks[2], (half2,), jnp.float32)  # BN.weight
    bn_b = 0.1 * jax.random.normal(ks[3], (half2,), jnp.float32)        # BN.bias

    x = jax.random.normal(ks[4], (N, planes, H, W), jnp.float32)        # PyTorch NCHW

    out = jax.block_until_ready(ibn_forward(x, in_g, in_b, bn_g, bn_b))
    ref = jax.block_until_ready(reference_forward(x, in_g, in_b, bn_g, bn_b))

    assert out.shape == (N, planes, H, W), out.shape
    np.testing.assert_allclose(np.asarray(out), np.asarray(ref), rtol=1e-4, atol=1e-4)

    print("KERNEL_OK")
</pallas_src>

<mosaic_0001>
module attributes {stable_mosaic.version = 11 : i64} {
  func.func @ibn_kernel(%arg0: i32, %arg1: memref<2x8x256xf32, #tpu.memory_space<vmem>>, %arg2: memref<1x8x1xf32, #tpu.memory_space<vmem>>, %arg3: memref<1x8x1xf32, #tpu.memory_space<vmem>>, %arg4: memref<2x8x256xf32, #tpu.memory_space<vmem>>) attributes {dimension_semantics = [#tpu.dimension_semantics<arbitrary>], iteration_bounds = array<i64: 1>, scalar_prefetch = 0 : i64, scratch_operands = 0 : i64, tpu.core_type = #tpu.core_type<tc>, window_params = [{pipeline_mode = #tpu.pipeline_mode<synchronous>, transform_indices = @transform_0, window_bounds = array<i64: 2, 8, 256>}, {pipeline_mode = #tpu.pipeline_mode<synchronous>, transform_indices = @transform_1, window_bounds = array<i64: 1, 8, 1>}, {pipeline_mode = #tpu.pipeline_mode<synchronous>, transform_indices = @transform_2, window_bounds = array<i64: 1, 8, 1>}, {pipeline_mode = #tpu.pipeline_mode<synchronous>, transform_indices = @transform_3, window_bounds = array<i64: 2, 8, 256>}]} {
    %c0 = arith.constant 0 : index
    %c0_0 = arith.constant 0 : index
    %c0_1 = arith.constant 0 : index
    %0 = vector.load %arg1[%c0, %c0_0, %c0_1] : memref<2x8x256xf32, #tpu.memory_space<vmem>>, vector<2x8x256xf32>
    %cst = arith.constant dense<0.000000e+00> : vector<2x8xf32>
    %1 = vector.multi_reduction <add>, %0, %cst [2] : vector<2x8x256xf32> to vector<2x8xf32>
    %2 = vector.shape_cast %1 : vector<2x8xf32> to vector<2x8x1xf32>
    %cst_2 = arith.constant 2.560000e+02 : f32
    %3 = vector.broadcast %cst_2 : f32 to vector<2x8x1xf32>
    %4 = arith.divf %2, %3 : vector<2x8x1xf32>
    %5 = vector.broadcast %4 : vector<2x8x1xf32> to vector<2x8x256xf32>
    %6 = arith.subf %0, %5 : vector<2x8x256xf32>
    %7 = arith.mulf %6, %6 : vector<2x8x256xf32>
    %cst_3 = arith.constant dense<0.000000e+00> : vector<2x8xf32>
    %8 = vector.multi_reduction <add>, %7, %cst_3 [2] : vector<2x8x256xf32> to vector<2x8xf32>
    %9 = vector.shape_cast %8 : vector<2x8xf32> to vector<2x8x1xf32>
    %cst_4 = arith.constant 2.560000e+02 : f32
    %10 = vector.broadcast %cst_4 : f32 to vector<2x8x1xf32>
    %11 = arith.divf %9, %10 : vector<2x8x1xf32>
    %cst_5 = arith.constant dense<0.000000e+00> : vector<2x8xf32>
    %12 = vector.multi_reduction <add>, %0, %cst_5 [2] : vector<2x8x256xf32> to vector<2x8xf32>
    %13 = vector.shape_cast %12 : vector<2x8xf32> to vector<2x8x1xf32>
    %cst_6 = arith.constant dense<0.000000e+00> : vector<8x1xf32>
    %14 = vector.multi_reduction <add>, %13, %cst_6 [0] : vector<2x8x1xf32> to vector<8x1xf32>
    %15 = vector.shape_cast %14 : vector<8x1xf32> to vector<1x8x1xf32>
    %cst_7 = arith.constant 5.120000e+02 : f32
    %16 = vector.broadcast %cst_7 : f32 to vector<1x8x1xf32>
    %17 = arith.divf %15, %16 : vector<1x8x1xf32>
    %18 = vector.broadcast %17 : vector<1x8x1xf32> to vector<2x8x256xf32>
    %19 = arith.subf %0, %18 : vector<2x8x256xf32>
    %20 = arith.mulf %19, %19 : vector<2x8x256xf32>
    %cst_8 = arith.constant dense<0.000000e+00> : vector<2x8xf32>
    %21 = vector.multi_reduction <add>, %20, %cst_8 [2] : vector<2x8x256xf32> to vector<2x8xf32>
    %22 = vector.shape_cast %21 : vector<2x8xf32> to vector<2x8x1xf32>
    %cst_9 = arith.constant dense<0.000000e+00> : vector<8x1xf32>
    %23 = vector.multi_reduction <add>, %22, %cst_9 [0] : vector<2x8x1xf32> to vector<8x1xf32>
    %24 = vector.shape_cast %23 : vector<8x1xf32> to vector<1x8x1xf32>
    %cst_10 = arith.constant 5.120000e+02 : f32
    %25 = vector.broadcast %cst_10 : f32 to vector<1x8x1xf32>
    %26 = arith.divf %24, %25 : vector<1x8x1xf32>
    %27 = vector.shape_cast %17 : vector<1x8x1xf32> to vector<1x8x1xf32>
    %28 = vector.broadcast %27 : vector<1x8x1xf32> to vector<2x8x1xf32>
    %29 = vector.shape_cast %26 : vector<1x8x1xf32> to vector<1x8x1xf32>
    %30 = vector.broadcast %29 : vector<1x8x1xf32> to vector<2x8x1xf32>
    %31 = tpu.iota {dimensions = array<i32: 1>} : vector<2x8x1xi32>
    %c4_i32 = arith.constant 4 : i32
    %32 = vector.broadcast %c4_i32 : i32 to vector<2x8x1xi32>
    %33 = arith.cmpi slt, %31, %32 : vector<2x8x1xi32>
    %34 = arith.select %33, %4, %28 : vector<2x8x1xi1>, vector<2x8x1xf32>
    %35 = arith.select %33, %11, %30 : vector<2x8x1xi1>, vector<2x8x1xf32>
    %c0_11 = arith.constant 0 : index
    %c0_12 = arith.constant 0 : index
    %c0_13 = arith.constant 0 : index
    %36 = vector.load %arg2[%c0_11, %c0_12, %c0_13] : memref<1x8x1xf32, #tpu.memory_space<vmem>>, vector<1x8x1xf32>
    %cst_14 = arith.constant 9.99999974E-6 : f32
    %37 = vector.broadcast %cst_14 : f32 to vector<2x8x1xf32>
    %38 = arith.addf %35, %37 : vector<2x8x1xf32>
    %39 = math.rsqrt %38 : vector<2x8x1xf32>
    %40 = vector.broadcast %36 : vector<1x8x1xf32> to vector<2x8x1xf32>
    %41 = arith.mulf %40, %39 : vector<2x8x1xf32>
    %c0_15 = arith.constant 0 : index
    %c0_16 = arith.constant 0 : index
    %c0_17 = arith.constant 0 : index
    %42 = vector.load %arg3[%c0_15, %c0_16, %c0_17] : memref<1x8x1xf32, #tpu.memory_space<vmem>>, vector<1x8x1xf32>
    %43 = arith.mulf %34, %41 : vector<2x8x1xf32>
    %44 = vector.broadcast %42 : vector<1x8x1xf32> to vector<2x8x1xf32>
    %45 = arith.subf %44, %43 : vector<2x8x1xf32>
    %46 = vector.broadcast %41 : vector<2x8x1xf32> to vector<2x8x256xf32>
    %47 = arith.mulf %0, %46 : vector<2x8x256xf32>
    %48 = vector.broadcast %45 : vector<2x8x1xf32> to vector<2x8x256xf32>
    %49 = arith.addf %47, %48 : vector<2x8x256xf32>
    %c0_18 = arith.constant 0 : index
    %c0_19 = arith.constant 0 : index
    %c0_20 = arith.constant 0 : index
    %50 = vector.load %arg4[%c0_18, %c0_19, %c0_20] : memref<2x8x256xf32, #tpu.memory_space<vmem>>, vector<2x8x256xf32>
    tpu.vector_store %arg4[%c0_18, %c0_19, %c0_20], %49 {strides = array<i32>} : memref<2x8x256xf32, #tpu.memory_space<vmem>>, vector<2x8x256xf32>,
    return
  }
  func.func @transform_0(%arg0: i32) -> (i32, i32, i32) {
    %c0_i32 = arith.constant 0 : i32
    %c0_i32_0 = arith.constant 0 : i32
    %c0_i32_1 = arith.constant 0 : i32
    %c0_i32_2 = arith.constant 0 : i32
    return %c0_i32, %c0_i32_0, %c0_i32_1 : i32, i32, i32
  }
  func.func @transform_1(%arg0: i32) -> (i32, i32, i32) {
    %c0_i32 = arith.constant 0 : i32
    %c0_i32_0 = arith.constant 0 : i32
    %c0_i32_1 = arith.constant 0 : i32
    %c0_i32_2 = arith.constant 0 : i32
    return %c0_i32, %c0_i32_0, %c0_i32_1 : i32, i32, i32
  }
  func.func @transform_2(%arg0: i32) -> (i32, i32, i32) {
    %c0_i32 = arith.constant 0 : i32
    %c0_i32_0 = arith.constant 0 : i32
    %c0_i32_1 = arith.constant 0 : i32
    %c0_i32_2 = arith.constant 0 : i32
    return %c0_i32, %c0_i32_0, %c0_i32_1 : i32, i32, i32
  }
  func.func @transform_3(%arg0: i32) -> (i32, i32, i32) {
    %c0_i32 = arith.constant 0 : i32
    %c0_i32_0 = arith.constant 0 : i32
    %c0_i32_1 = arith.constant 0 : i32
    %c0_i32_2 = arith.constant 0 : i32
    return %c0_i32, %c0_i32_0, %c0_i32_1 : i32, i32, i32
  }
}

</mosaic_0001>

<llo_original>
// kernel: tpu_custom_call.1
$region0: #{tpu_custom_call.1}
  #allocation0 [shape = 'u32[]', space=smem, size = 0x4, offset = 0x4, fixed_abs, tag = 'smem constant byte address 0x4 - core index']
  #allocation1 [shape = 'u32[144,128]{1,0:T(1,128)}', space=vmem, size = 0x12000, scoped, tag = 'internal scratch']
  %s0 = inlined_call_operand.hbm [shape: f32[2,8,256], index: 0, kind: input, shape index: {}]
  %s1 = inlined_call_operand.vmem [shape: f32[1,8,1], index: 1, kind: input, shape index: {}]
  %s2 = inlined_call_operand.vmem [shape: f32[1,8,1], index: 2, kind: input, shape index: {}]
  %s3 = inlined_call_operand.hbm [shape: f32[2,8,256], index: 3, kind: output, shape index: {}]
  %s4 = sld [smem:[#allocation0]]
  $region26: #{tpu_custom_call.1} parent=0
    _
  %s6 = ssub.s32 1, %s4
  %s7 = scalar_select 0, %s6, %s4
  $region1: #{tpu_custom_call.1} parent=0
    #allocation2 [shape = 'u8[16384]{0}', space=vmem, size = 0x4000, scoped, tag = 'input window, operand 0, single buffered']
    #allocation3 [shape = 's32[1]{0}', space=sflag, size = 0x4, scoped, tag = 'scoped memory for tpu_custom_call.1']
    #allocation4 [shape = 's32[1]{0}', space=sflag, size = 0x4, scoped, tag = 'scoped memory for tpu_custom_call.1']
    #allocation5 [shape = 'u8[16384]{0}', space=vmem, size = 0x4000, scoped, tag = 'output window, operand 0, single buffered']
    %8 = vsyncpa [#allocation3], 0
    %9 = vsyncpa [#allocation4], 0
    // Predicated region
    $region2: #{tpu_custom_call.1} parent=1 // pred_check
      _
    $region3: #{tpu_custom_call.1} parent=1 // pred_check_branch
      %11 = sbr.rel (0) target = $region5
    $region4: #{tpu_custom_call.1} parent=1 // pred_region
      %s13 = ssub.s32 512, 512
      %14 = vsyncadd [#allocation3], %s13
      %s15 = sshll.u32 [#allocation2], 4
      %s16 = int_to_ptr.vmem [resolvable:$true] %s15
      %21 = dma.hbm_to_vmem [thread:$0]  %s0, 512, %s16, [#allocation3], 256, 256, 16
    $region5: #{tpu_custom_call.1} parent=1 // pred_fallthru
      _
    // Predicated region
    $region6: #{tpu_custom_call.1} parent=1 // pred_check
      _
    $region7: #{tpu_custom_call.1} parent=1 // pred_check_branch
      %23 = sbr.rel (0) target = $region9
    $region8: #{tpu_custom_call.1} parent=1 // pred_region
      _
    $region9: #{tpu_custom_call.1} parent=1 // pred_fallthru
      _
    // Predicated region
    $region10: #{tpu_custom_call.1} parent=1 // pred_check
      _
    $region11: #{tpu_custom_call.1} parent=1 // pred_check_branch
      %25 = sbr.rel (0) target = $region13
    $region12: #{tpu_custom_call.1} parent=1 // pred_region
      _
    $region13: #{tpu_custom_call.1} parent=1 // pred_fallthru
      _
    // Predicated region
    $region14: #{tpu_custom_call.1} parent=1 // pred_check
      _
    $region15: #{tpu_custom_call.1} parent=1 // pred_check_branch
      %27 = sbr.rel (0) target = $region17
    $region16: #{tpu_custom_call.1} parent=1 // pred_region
      %28 = dma.done [#allocation3], 512
    $region17: #{tpu_custom_call.1} parent=1 // pred_fallthru
      _
    %v29 = vld [vmem:[#allocation2] sm:$0xff]
    %v30 = vld [vmem:[#allocation2 + $0x8] sm:$0xff]
    %v31 = vld [vmem:[#allocation2 + $0x10] sm:$0xff]
    %v32 = vld [vmem:[#allocation2 + $0x18] sm:$0xff]
    %v33 = vadd.f32 %v29, %v30
    %34 = vadd.xlane.f32.xlu0 %v33
    %v35 = vpop.xlane.xlu0 %34
    %v36 = vadd.f32 %v31, %v32
    %37 = vadd.xlane.f32.xlu0 %v36
    %v38 = vpop.xlane.xlu0 %37
    %v39 = vrcp.pop 256.0
    %v40 = vmul.f32 %v35, %v39
    %v41 = vmul.f32 %v38, %v39
    %v42 = vsub.f32 %v29, %v40
    %v43 = vsub.f32 %v30, %v40
    %v44 = vsub.f32 %v31, %v41
    %v45 = vsub.f32 %v32, %v41
    %v46 = vmul.f32 %v42, %v42
    %v47 = vmul.f32 %v43, %v43
    %v48 = vmul.f32 %v44, %v44
    %v49 = vmul.f32 %v45, %v45
    %v50 = vadd.f32 %v46, %v47
    %51 = vadd.xlane.f32.xlu0 %v50
    %v52 = vpop.xlane.xlu0 %51
    %v53 = vadd.f32 %v48, %v49
    %54 = vadd.xlane.f32.xlu0 %v53
    %v55 = vpop.xlane.xlu0 %54
    %v56 = vmul.f32 %v52, %v39
    %v57 = vmul.f32 %v55, %v39
    %v58 = vadd.f32 %v35, %v38
    %v59 = vrcp.pop 512.0
    %v60 = vmul.f32 %v58, %v59
    %v61 = vsub.f32 %v29, %v60
    %v62 = vsub.f32 %v30, %v60
    %v63 = vsub.f32 %v31, %v60
    %v64 = vsub.f32 %v32, %v60
    %v65 = vmul.f32 %v61, %v61
    %v66 = vmul.f32 %v62, %v62
    %v67 = vmul.f32 %v63, %v63
    %v68 = vmul.f32 %v64, %v64
    %v69 = vadd.f32 %v65, %v66
    %70 = vadd.xlane.f32.xlu0 %v69
    %v71 = vpop.xlane.xlu0 %70
    %v72 = vadd.f32 %v67, %v68
    %73 = vadd.xlane.f32.xlu0 %v72
    %v74 = vpop.xlane.xlu0 %73
    %v75 = vadd.f32 %v71, %v74
    %v76 = vmul.f32 %v75, %v59
    %v77 = vlaneseq
    %v78 = vshrl.u32 %v77, 7
    %vm79 = vcmp.lt.s32.totalorder %v78, 4
    %v80 = vsel %vm79, %v40, %v60
    %v81 = vsel %vm79, %v41, %v60
    %v82 = vsel %vm79, %v56, %v76
    %v83 = vsel %vm79, %v57, %v76
    %v84 = vld [vmem:[%s1] sm:$0xff]
    %v85 = vadd.f32 %v82, 1e-05
    %v86 = vadd.f32 %v83, 1e-05
    %v87 = vrsqrt.pop %v85
    %v88 = vrsqrt.pop %v86
    %v89 = vmul.f32 %v84, %v87
    %v90 = vmul.f32 %v84, %v88
    %v91 = vld [vmem:[%s2] sm:$0xff]
    %v92 = vmul.f32 %v80, %v89
    %v93 = vmul.f32 %v81, %v90
    %v94 = vsub.f32 %v91, %v92
    %v95 = vsub.f32 %v91, %v93
    %97 = vset.pattern.permute.xlu0 0
    %98 = vperm.xlu0 %97, %v89
    %v99 = vpop.permute.xlu0 %98
    %102 = vset.pattern.permute.xlu0 0
    %103 = vperm.xlu0 %102, %v90
    %v104 = vpop.permute.xlu0 %103
    %v106 = vmul.f32 %v29, %v99
    %v107 = vmul.f32 %v30, %v99
    %v108 = vmul.f32 %v31, %v104
    %v109 = vmul.f32 %v32, %v104
    %111 = vset.pattern.permute.xlu0 0
    %112 = vperm.xlu0 %111, %v94
    %v113 = vpop.permute.xlu0 %112
    %116 = vset.pattern.permute.xlu0 0
    %117 = vperm.xlu0 %116, %v95
    %v118 = vpop.permute.xlu0 %117
    %v120 = vadd.f32 %v106, %v113
    %v121 = vadd.f32 %v107, %v113
    %v122 = vadd.f32 %v108, %v118
    %v123 = vadd.f32 %v109, %v118
    %124 = vst [vmem:[#allocation5] sm:$0xff] %v120
    %125 = vst [vmem:[#allocation5 + $0x8] sm:$0xff] %v121
    %126 = vst [vmem:[#allocation5 + $0x10] sm:$0xff] %v122
    %127 = vst [vmem:[#allocation5 + $0x18] sm:$0xff] %v123
    // Predicated region
    $region18: #{tpu_custom_call.1} parent=1 // pred_check
      _
    $region19: #{tpu_custom_call.1} parent=1 // pred_check_branch
      %129 = sbr.rel (0) target = $region21
    $region20: #{tpu_custom_call.1} parent=1 // pred_region
      %s131 = ssub.s32 512, 512
      %132 = vsyncadd [#allocation4], %s131
      %s133 = sshll.u32 [#allocation5], 4
      %s134 = int_to_ptr.vmem [resolvable:$true] %s133
      %139 = dma.vmem_to_hbm [thread:$0]  %s134, 512, %s3, [#allocation4], 256, 256, 16
    $region21: #{tpu_custom_call.1} parent=1 // pred_fallthru
      _
    // Predicated region
    $region22: #{tpu_custom_call.1} parent=1 // pred_check
      _
    $region23: #{tpu_custom_call.1} parent=1 // pred_check_branch
      %141 = sbr.rel (0) target = $region25
    $region24: #{tpu_custom_call.1} parent=1 // pred_region
      %142 = dma.done [#allocation4], 512
    $region25: #{tpu_custom_call.1} parent=1 // pred_fallthru
      _
    %143 = vsyncpa [#allocation3], 1
    %144 = vsyncpa [#allocation4], 1

</llo_original>
